<compile_context>
chip_gen: v5e
topology: v5e:2x2
jax: 0.10.0
libtpu: 0.0.40
codegen_flags: <defaults>
</compile_context>

<pallas_src>
import jax
import jax.numpy as jnp
from jax import lax
from jax.experimental import pallas as pl
from jax.experimental.pallas import tpu as pltpu


_LANE = 128      # vreg lane width
_SUBLANE = 8     # vreg sublane count


def _round_up(x, m):
    return (x + m - 1) // m * m


def _conv_stats_kernel(patches_ref, w_ref, conv_ref, stats_ref):
    """One M-tile: conv = patches @ w (MXU, f32 accum) + BN partial sums."""
    conv = jnp.dot(patches_ref[...], w_ref[...],
                   preferred_element_type=jnp.float32)
    conv_ref[...] = conv

    # Per-channel partial sum / sum-of-squares (cross-sublane reduce -> XLU).
    tile_sum = jnp.sum(conv, axis=0, keepdims=True)          # (1, O_pad)
    tile_ssq = jnp.sum(conv * conv, axis=0, keepdims=True)   # (1, O_pad)

    # Pack into an (8, O_pad) aligned block: row 0 = sum, row 1 = sumsq.
    sub = lax.broadcasted_iota(jnp.int32, stats_ref.shape, 0)
    stats_ref[...] = jnp.where(
        sub == 0, jnp.broadcast_to(tile_sum, stats_ref.shape),
        jnp.where(sub == 1, jnp.broadcast_to(tile_ssq, stats_ref.shape), 0.0))


def _bn_relu_kernel(conv_ref, scale_ref, shift_ref, out_ref):
    """y = relu(conv * scale + shift): folded BN affine + ReLU (lane-dense)."""
    y = conv_ref[...] * scale_ref[...] + shift_ref[...]
    out_ref[...] = jnp.maximum(y, 0.0).astype(out_ref.dtype)


def _im2col(x_nchw, kh, kw, stride, padding):
    """NCHW -> (N*OH*OW, C*KH*KW) patch matrix (plain-JAX glue).

    # TODO(synk): fold im2col into pass 1 as an implicit GEMM (slice a haloed
    # NHWC input block per (kh, kw) tap with pl.ds inside the kernel) to avoid
    # the KH*KW-fold inflation of input HBM traffic.
    """
    n, c, h, w = x_nchw.shape
    xp = jnp.pad(x_nchw,
                 ((0, 0), (0, 0), (padding, padding), (padding, padding)))
    oh = (h + 2 * padding - kh) // stride + 1
    ow = (w + 2 * padding - kw) // stride + 1
    cols = []
    for i in range(kh):
        for j in range(kw):
            cols.append(xp[:, :, i:i + stride * oh:stride,
                              j:j + stride * ow:stride])
    p = jnp.stack(cols, axis=0)            # (KH*KW, N, C, OH, OW)
    p = p.transpose(1, 3, 4, 2, 0)         # (N, OH, OW, C, KH*KW)
    return p.reshape(n * oh * ow, c * kh * kw), oh, ow


def basic_conv2d(x, weight, bias, gamma, beta, *, stride=1, padding=0,
                 eps=1e-5, block_m=1024, compute_dtype=jnp.float32):
    """Forward pass of BasicConv2d (training-mode BatchNorm statistics).

    x:      (N, C_in, H, W)        float32, NCHW (PyTorch convention)
    weight: (C_out, C_in, KH, KW)  float32
    bias, gamma, beta: (C_out,)    float32
    returns (N, C_out, OH, OW)     float32, NCHW

    compute_dtype: matmul operand dtype (jnp.bfloat16 recommended on v6e/v7x);
    accumulation and BatchNorm statistics are always float32.
    """
    n, c_in, _, _ = x.shape
    c_out, _, kh, kw = weight.shape

    # ---- plain-JAX glue: im2col + lane-dense zero padding ------------------
    patches, oh, ow = _im2col(x, kh, kw, stride, padding)      # (M, K)
    m, k = patches.shape

    k_pad = _round_up(k, _LANE)        # clean (8,128) vregs on the contraction
    o_pad = _round_up(c_out, _LANE)    # lane-dense output -> unmasked stores
    itemsize = jnp.dtype(compute_dtype).itemsize

    # M-tile: requested block_m capped by an explicit VMEM budget so the
    # double-buffered (patches + conv-out) tiles stay well inside the scoped
    # limit on every generation (v7x: 64 MiB physical / 32 MiB scoped).
    budget = 24 * 1024 * 1024
    per_row = 2 * (k_pad * itemsize + o_pad * 4)     # 2x-buffered in + out
    cap_rows = max(_SUBLANE, (budget - 2 * k_pad * o_pad * itemsize) // per_row)
    tm = max(_SUBLANE, _round_up(min(block_m, m, cap_rows), _SUBLANE))
    m_pad = _round_up(m, tm)
    grid_m = m_pad // tm

    patches = jnp.pad(patches, ((0, m_pad - m), (0, k_pad - k)))
    patches = patches.astype(compute_dtype)
    w_mat = weight.reshape(c_out, c_in * kh * kw).T            # (K, O)
    w_mat = jnp.pad(w_mat, ((0, k_pad - k), (0, o_pad - c_out)))
    w_mat = w_mat.astype(compute_dtype)
    # NOTE: the conv bias is NOT added: training-mode BatchNorm subtracts the
    # per-channel mean, which cancels any constant per-channel offset exactly.
    del bias

    # ---- pass 1: conv matmul + streamed BN sum / sum-of-squares ------------
    cost1 = pl.CostEstimate(
        flops=2 * m_pad * k_pad * o_pad,
        transcendentals=0,
        bytes_accessed=(m_pad * k_pad * itemsize + k_pad * o_pad * itemsize
                        + m_pad * o_pad * 4 + grid_m * _SUBLANE * o_pad * 4),
    )
    conv_flat, stats = pl.pallas_call(
        _conv_stats_kernel,
        out_shape=(
            jax.ShapeDtypeStruct((m_pad, o_pad), jnp.float32),
            jax.ShapeDtypeStruct((grid_m * _SUBLANE, o_pad), jnp.float32),
        ),
        grid_spec=pltpu.PrefetchScalarGridSpec(
            num_scalar_prefetch=0,
            grid=(grid_m,),
            in_specs=[
                pl.BlockSpec((tm, k_pad), lambda i: (i, 0)),
                pl.BlockSpec((k_pad, o_pad), lambda i: (0, 0)),
            ],
            out_specs=(
                pl.BlockSpec((tm, o_pad), lambda i: (i, 0)),
                pl.BlockSpec((_SUBLANE, o_pad), lambda i: (i, 0)),
            ),
        ),
        compiler_params=pltpu.CompilerParams(
            dimension_semantics=("parallel",),
            vmem_limit_bytes=32 * 1024 * 1024,
        ),
        cost_estimate=cost1,
    )(patches, w_mat)

    # ---- tiny O(C_out) glue: combine partials, fold BN into scale/shift ----
    stats = stats.reshape(grid_m, _SUBLANE, o_pad).sum(axis=0)   # (8, O_pad)
    total_sum, total_ssq = stats[0], stats[1]
    inv_m = 1.0 / float(m)                 # statistics over the REAL M rows
    mean = total_sum * inv_m
    var = jnp.maximum(total_ssq * inv_m - mean * mean, 0.0)
    gamma_pad = jnp.pad(gamma, (0, o_pad - c_out))
    beta_pad = jnp.pad(beta, (0, o_pad - c_out))
    scale = gamma_pad * lax.rsqrt(var + eps)                     # (O_pad,)
    shift = beta_pad - mean * scale
    scale2 = scale.reshape(1, o_pad).astype(jnp.float32)
    shift2 = shift.reshape(1, o_pad).astype(jnp.float32)

    # ---- pass 2: y = relu(conv * scale + shift) ----------------------------
    cost2 = pl.CostEstimate(
        flops=2 * m_pad * o_pad,
        transcendentals=0,
        bytes_accessed=2 * m_pad * o_pad * 4 + 2 * o_pad * 4,
    )
    out_flat = pl.pallas_call(
        _bn_relu_kernel,
        out_shape=jax.ShapeDtypeStruct((m_pad, o_pad), x.dtype),
        grid_spec=pltpu.PrefetchScalarGridSpec(
            num_scalar_prefetch=0,
            grid=(grid_m,),
            in_specs=[
                pl.BlockSpec((tm, o_pad), lambda i: (i, 0)),
                pl.BlockSpec((1, o_pad), lambda i: (0, 0)),
                pl.BlockSpec((1, o_pad), lambda i: (0, 0)),
            ],
            out_specs=pl.BlockSpec((tm, o_pad), lambda i: (i, 0)),
        ),
        compiler_params=pltpu.CompilerParams(
            dimension_semantics=("parallel",),
            vmem_limit_bytes=32 * 1024 * 1024,
        ),
        cost_estimate=cost2,
    )(conv_flat, scale2, shift2)

    # (M_pad, O_pad) -> (N, OH, OW, C_out) -> NCHW.  (The trailing transpose
    # can be dropped if the downstream consumer accepts NHWC.)
    out = out_flat[:m, :c_out].reshape(n, oh, ow, c_out)
    return out.transpose(0, 3, 1, 2)


if __name__ == "__main__":
    # BasicConv2d(4, 8, kernel_size=3, stride=1, padding=1) at small shapes.
    N, C_IN, H, W = 2, 4, 16, 16
    C_OUT, KH, KW = 8, 3, 3
    STRIDE, PADDING = 1, 1

    key = jax.random.PRNGKey(0)
    kx, kw_, kb, kg, kbt = jax.random.split(key, 5)

    x = jax.random.normal(kx, (N, C_IN, H, W), dtype=jnp.float32)
    weight = jax.random.normal(kw_, (C_OUT, C_IN, KH, KW),
                               dtype=jnp.float32) * 0.1
    bias = jax.random.normal(kb, (C_OUT,), dtype=jnp.float32) * 0.1
    gamma = 1.0 + 0.1 * jax.random.normal(kg, (C_OUT,), dtype=jnp.float32)
    beta = 0.1 * jax.random.normal(kbt, (C_OUT,), dtype=jnp.float32)

    # block_m=128 so the small demo (M = N*OH*OW = 512) still exercises a
    # multi-step, pipelined grid (4 tiles).  Real sizes use the 1024 default.
    out = basic_conv2d(x, weight, bias, gamma, beta,
                       stride=STRIDE, padding=PADDING, block_m=128)
    jax.block_until_ready(out)

    # Pure-JAX reference: conv + training-mode BatchNorm + ReLU.
    conv_ref = lax.conv_general_dilated(
        x, weight, window_strides=(STRIDE, STRIDE),
        padding=((PADDING, PADDING), (PADDING, PADDING)),
        dimension_numbers=("NCHW", "OIHW", "NCHW"),
    ) + bias.reshape(1, C_OUT, 1, 1)
    mean = conv_ref.mean(axis=(0, 2, 3), keepdims=True)
    var = ((conv_ref - mean) ** 2).mean(axis=(0, 2, 3), keepdims=True)
    ref = jnp.maximum(
        (conv_ref - mean) / jnp.sqrt(var + 1e-5)
        * gamma.reshape(1, C_OUT, 1, 1) + beta.reshape(1, C_OUT, 1, 1),
        0.0,
    )
    assert out.shape == (N, C_OUT, H, W)
    assert jnp.allclose(out, ref, atol=1e-4, rtol=1e-4), (
        float(jnp.max(jnp.abs(out - ref))))

    # bf16-operand / f32-accumulate path (recommended for v6e/v7x MXUs).
    out_bf16 = basic_conv2d(x, weight, bias, gamma, beta,
                            stride=STRIDE, padding=PADDING, block_m=128,
                            compute_dtype=jnp.bfloat16)
    jax.block_until_ready(out_bf16)
    assert jnp.allclose(out_bf16, ref, atol=5e-2, rtol=5e-2), (
        float(jnp.max(jnp.abs(out_bf16 - ref))))

    print("KERNEL_OK")
</pallas_src>

<mosaic_0001>
module attributes {stable_mosaic.version = 11 : i64} {
  func.func @_conv_stats_kernel(%arg0: i32, %arg1: memref<128x128xf32, #tpu.memory_space<vmem>>, %arg2: memref<128x128xf32, #tpu.memory_space<vmem>>, %arg3: memref<128x128xf32, #tpu.memory_space<vmem>>, %arg4: memref<8x128xf32, #tpu.memory_space<vmem>>) attributes {dimension_semantics = [#tpu.dimension_semantics<parallel>], iteration_bounds = array<i64: 4>, scalar_prefetch = 0 : i64, scratch_operands = 0 : i64, tpu.core_type = #tpu.core_type<tc>, window_params = [{transform_indices = @transform_0, window_bounds = array<i64: 128, 128>}, {pipeline_mode = #tpu.pipeline_mode<synchronous>, transform_indices = @transform_1, window_bounds = array<i64: 128, 128>}, {transform_indices = @transform_2, window_bounds = array<i64: 128, 128>}, {transform_indices = @transform_3, window_bounds = array<i64: 8, 128>}]} {
    %c0 = arith.constant 0 : index
    %c0_0 = arith.constant 0 : index
    %0 = vector.load %arg1[%c0, %c0_0] : memref<128x128xf32, #tpu.memory_space<vmem>>, vector<128x128xf32>
    %c0_1 = arith.constant 0 : index
    %c0_2 = arith.constant 0 : index
    %1 = vector.load %arg2[%c0_1, %c0_2] : memref<128x128xf32, #tpu.memory_space<vmem>>, vector<128x128xf32>
    %cst = arith.constant dense<0.000000e+00> : vector<128x128xf32>
    %2 = tpu.matmul %0, %1, %cst {dimension_numbers = #tpu.dot_dimension_numbers<[1], [0], [0], [1], [0, 0, 1, 1], [], []>} : vector<128x128xf32>, vector<128x128xf32>, vector<128x128xf32> -> vector<128x128xf32>
    %c0_3 = arith.constant 0 : index
    %c0_4 = arith.constant 0 : index
    %3 = vector.load %arg3[%c0_3, %c0_4] : memref<128x128xf32, #tpu.memory_space<vmem>>, vector<128x128xf32>
    tpu.vector_store %arg3[%c0_3, %c0_4], %2 {strides = array<i32>} : memref<128x128xf32, #tpu.memory_space<vmem>>, vector<128x128xf32>,
    %cst_5 = arith.constant dense<0.000000e+00> : vector<128xf32>
    %4 = vector.multi_reduction <add>, %2, %cst_5 [0] : vector<128x128xf32> to vector<128xf32>
    %5 = vector.shape_cast %4 : vector<128xf32> to vector<1x128xf32>
    %6 = arith.mulf %2, %2 : vector<128x128xf32>
    %cst_6 = arith.constant dense<0.000000e+00> : vector<128xf32>
    %7 = vector.multi_reduction <add>, %6, %cst_6 [0] : vector<128x128xf32> to vector<128xf32>
    %8 = vector.shape_cast %7 : vector<128xf32> to vector<1x128xf32>
    %9 = tpu.iota {dimensions = array<i32: 0>} : vector<8x128xi32>
    %c0_i32 = arith.constant 0 : i32
    %10 = vector.broadcast %c0_i32 : i32 to vector<8x128xi32>
    %11 = arith.cmpi eq, %9, %10 : vector<8x128xi32>
    %12 = vector.shape_cast %5 : vector<1x128xf32> to vector<1x128xf32>
    %13 = vector.broadcast %12 : vector<1x128xf32> to vector<8x128xf32>
    %c1_i32 = arith.constant 1 : i32
    %14 = vector.broadcast %c1_i32 : i32 to vector<8x128xi32>
    %15 = arith.cmpi eq, %9, %14 : vector<8x128xi32>
    %16 = vector.shape_cast %8 : vector<1x128xf32> to vector<1x128xf32>
    %17 = vector.broadcast %16 : vector<1x128xf32> to vector<8x128xf32>
    %cst_7 = arith.constant 0.000000e+00 : f32
    %18 = vector.broadcast %cst_7 : f32 to vector<8x128xf32>
    %19 = arith.select %15, %17, %18 : vector<8x128xi1>, vector<8x128xf32>
    %20 = arith.select %11, %13, %19 : vector<8x128xi1>, vector<8x128xf32>
    %c0_8 = arith.constant 0 : index
    %c0_9 = arith.constant 0 : index
    %21 = vector.load %arg4[%c0_8, %c0_9] : memref<8x128xf32, #tpu.memory_space<vmem>>, vector<8x128xf32>
    tpu.vector_store %arg4[%c0_8, %c0_9], %20 {strides = array<i32>} : memref<8x128xf32, #tpu.memory_space<vmem>>, vector<8x128xf32>,
    return
  }
  func.func @transform_0(%arg0: i32) -> (i32, i32) {
    %c0_i32 = arith.constant 0 : i32
    %c0_i32_0 = arith.constant 0 : i32
    return %arg0, %c0_i32 : i32, i32
  }
  func.func @transform_1(%arg0: i32) -> (i32, i32) {
    %c0_i32 = arith.constant 0 : i32
    %c0_i32_0 = arith.constant 0 : i32
    %c0_i32_1 = arith.constant 0 : i32
    return %c0_i32, %c0_i32_0 : i32, i32
  }
  func.func @transform_2(%arg0: i32) -> (i32, i32) {
    %c0_i32 = arith.constant 0 : i32
    %c0_i32_0 = arith.constant 0 : i32
    return %arg0, %c0_i32 : i32, i32
  }
  func.func @transform_3(%arg0: i32) -> (i32, i32) {
    %c0_i32 = arith.constant 0 : i32
    %c0_i32_0 = arith.constant 0 : i32
    return %arg0, %c0_i32 : i32, i32
  }
}

</mosaic_0001>

<llo_original>
// kernel: tpu_custom_call.1
$region0: #{tpu_custom_call.1}
  #allocation0 [shape = 'u32[]', space=smem, size = 0x4, offset = 0x4, fixed_abs, tag = 'smem constant byte address 0x4 - core index']
  #allocation1 [shape = 'u32[72,128]{1,0:T(1,128)}', space=vmem, size = 0x9000, scoped, tag = 'internal scratch']
  %s0 = inlined_call_operand.hbm [shape: f32[512,128], index: 0, kind: input, shape index: {}]
  %s1 = inlined_call_operand.hbm [shape: f32[128,128], index: 1, kind: input, shape index: {}]
  %s2 = inlined_call_operand.hbm [shape: f32[512,128], index: 2, kind: output, shape index: {0}]
  %s3 = inlined_call_operand.hbm [shape: f32[32,128], index: 3, kind: output, shape index: {1}]
  %4 = xla_tuple %s2, %s3
  %s5 = sld [smem:[#allocation0]]
  $region57: #{tpu_custom_call.1} parent=0
    _
  %s7 = ssub.s32 1, %s5
  %s8 = scalar_select 0, %s7, %s5
  $region1: #{tpu_custom_call.1} parent=0
    #allocation2 [shape = 'u8[131072]{0}', space=vmem, size = 0x20000, scoped, tag = 'input window, operand 0']
    #allocation3 [shape = 's32[2]{0}', space=sflag, size = 0x8, scoped, tag = 'scoped memory for tpu_custom_call.1']
    #allocation4 [shape = 's32[2]{0}', space=sflag, size = 0x8, scoped, tag = 'scoped memory for tpu_custom_call.1']
    #allocation5 [shape = 'u8[65536]{0}', space=vmem, size = 0x10000, scoped, tag = 'input window, operand 1, single buffered']
    #allocation6 [shape = 's32[1]{0}', space=sflag, size = 0x4, scoped, tag = 'scoped memory for tpu_custom_call.1']
    #allocation7 [shape = 'u8[131072]{0}', space=vmem, size = 0x20000, scoped, tag = 'output window, operand 0']
    #allocation8 [shape = 'u8[8192]{0}', space=vmem, size = 0x2000, scoped, tag = 'output window, operand 1']
    #allocation9 [shape = 's32[2]{0}', space=sflag, size = 0x8, scoped, tag = 'scoped memory for tpu_custom_call.1']
    %9 = vsyncpa [#allocation3], 0
    %s10 = scalar_lea.sflag [#allocation3], 1
    %11 = vsyncpa %s10, 0
    %12 = vsyncpa [#allocation6], 0
    %13 = vsyncpa [#allocation4], 0
    %s14 = scalar_lea.sflag [#allocation4], 1
    %15 = vsyncpa %s14, 0
    %16 = vsyncpa [#allocation9], 0
    %s17 = scalar_lea.sflag [#allocation9], 1
    %18 = vsyncpa %s17, 0
    loop: start=0, step=1, limit=6
    $region2: #{tpu_custom_call.1} parent=1 // loop_pre_header
      _
    $region3: #{tpu_custom_call.1} parent=1 // loop_header
      %s20 = sphi 0, %s24
      %p21 = scmp.ge.s32.totalorder %s20, 6
      %s30 = sphi 0, %s32
      %s33 = sphi 0, %s30
      %s34 = sphi 0, %s33
      %s50 = sphi 0, %s34
      %s54 = sphi 0, %s54
      %s56 = sphi 0, %s54
      %s57 = sphi 0, %s56
      %s71 = sphi 0, %s57
      %s77 = sphi 0, %s79
      %s80 = sphi 0, %s77
      %s81 = sphi 0, %s80
      %s97 = sphi 0, %s81
      %s103 = sphi 0, %s105
      %s106 = sphi 0, %s103
      %s107 = sphi 0, %s106
      %s123 = sphi 0, %s107
    $region4: #{tpu_custom_call.1} parent=1 // loop_header_branch
      %23 = sbr.rel (%p21) target = $region8
    $region5: #{tpu_custom_call.1} parent=1 // loop_body
      %s25 = ssub.s32 %s20, 1
      %s26 = ssub.s32 %s20, 2
      %s27 = sadd.s32 %s20, 1
      %s28 = ssub.s32 %s20, %s27
      %p29 = scmp.eq.s32.totalorder %s28, 0
      %s31 = sadd.s32 %s30, 1
      %s32 = scalar_select %p29, %s30, %s31
      %p35 = pneg %p29
      %p36 = scmp.eq.s32.totalorder %s20, 3
      %p37 = por %p35, %p36
      %p38 = scmp.ne.s32.totalorder %s30, %s33
      %p39 = scmp.eq.s32.totalorder %s20, 0
      %p40 = por %p38, %p39
      %p41 = scmp.ne.s32.totalorder %s30, %s33
      %p42 = scmp.eq.s32.totalorder %s25, 3
      %p43 = por %p41, %p42
      %p44 = scmp.ne.s32.totalorder %s33, %s34
      %p45 = scmp.eq.s32.totalorder %s25, 0
      %p46 = por %p44, %p45
      %p47 = scmp.ne.s32.totalorder %s33, %s34
      %p48 = scmp.eq.s32.totalorder %s26, 3
      %p49 = por %p47, %p48
      %p51 = scmp.ne.s32.totalorder %s34, %s50
      %p52 = scmp.eq.s32.totalorder %s26, 0
      %p53 = por %p51, %p52
      %s55 = sadd.s32 %s54, 1
      %p58 = scmp.eq.s32.totalorder %s20, 3
      %p59 = scmp.ne.s32.totalorder %s54, %s56
      %p60 = scmp.eq.s32.totalorder %s20, 0
      %p61 = por %p59, %p60
      %p62 = scmp.ne.s32.totalorder %s54, %s56
      %p63 = scmp.eq.s32.totalorder %s25, 3
      %p64 = por %p62, %p63
      %p65 = scmp.ne.s32.totalorder %s56, %s57
      %p66 = scmp.eq.s32.totalorder %s25, 0
      %p67 = por %p65, %p66
      %p68 = scmp.ne.s32.totalorder %s56, %s57
      %p69 = scmp.eq.s32.totalorder %s26, 3
      %p70 = por %p68, %p69
      %p72 = scmp.ne.s32.totalorder %s57, %s71
      %p73 = scmp.eq.s32.totalorder %s26, 0
      %p74 = por %p72, %p73
      %s75 = ssub.s32 %s20, %s27
      %p76 = scmp.eq.s32.totalorder %s75, 0
      %s78 = sadd.s32 %s77, 1
      %s79 = scalar_select %p76, %s77, %s78
      %p82 = pneg %p76
      %p83 = scmp.eq.s32.totalorder %s20, 3
      %p84 = por %p82, %p83
      %p85 = scmp.ne.s32.totalorder %s77, %s80
      %p86 = scmp.eq.s32.totalorder %s20, 0
      %p87 = por %p85, %p86
      %p88 = scmp.ne.s32.totalorder %s77, %s80
      %p89 = scmp.eq.s32.totalorder %s25, 3
      %p90 = por %p88, %p89
      %p91 = scmp.ne.s32.totalorder %s80, %s81
      %p92 = scmp.eq.s32.totalorder %s25, 0
      %p93 = por %p91, %p92
      %p94 = scmp.ne.s32.totalorder %s80, %s81
      %p95 = scmp.eq.s32.totalorder %s26, 3
      %p96 = por %p94, %p95
      %p98 = scmp.ne.s32.totalorder %s81, %s97
      %p99 = scmp.eq.s32.totalorder %s26, 0
      %p100 = por %p98, %p99
      %s101 = ssub.s32 %s20, %s27
      %p102 = scmp.eq.s32.totalorder %s101, 0
      %s104 = sadd.s32 %s103, 1
      %s105 = scalar_select %p102, %s103, %s104
      %p108 = pneg %p102
      %p109 = scmp.eq.s32.totalorder %s20, 3
      %p110 = por %p108, %p109
      %p111 = scmp.ne.s32.totalorder %s103, %s106
      %p112 = scmp.eq.s32.totalorder %s20, 0
      %p113 = por %p111, %p112
      %p114 = scmp.ne.s32.totalorder %s103, %s106
      %p115 = scmp.eq.s32.totalorder %s25, 3
      %p116 = por %p114, %p115
      %p117 = scmp.ne.s32.totalorder %s106, %s107
      %p118 = scmp.eq.s32.totalorder %s25, 0
      %p119 = por %p117, %p118
      %p120 = scmp.ne.s32.totalorder %s106, %s107
      %p121 = scmp.eq.s32.totalorder %s26, 3
      %p122 = por %p120, %p121
      %p124 = scmp.ne.s32.totalorder %s107, %s123
      %p125 = scmp.eq.s32.totalorder %s26, 0
      %p126 = por %p124, %p125
      %p127 = scmp.le.s32.totalorder 1, %s20
      %p128 = scmp.lt.s32.totalorder %s20, 5
      %p129 = pnand %p127, %p128
      %p130 = pneg %p129
      // Predicated region
      $region9: #{tpu_custom_call.1} parent=5 // pred_check
        _
      $region10: #{tpu_custom_call.1} parent=5 // pred_check_branch
        %132 = sbr.rel (%p129) target = $region12
      $region11: #{tpu_custom_call.1} parent=5 // pred_region
        %s133 = ssub.s32 %s20, 1
        // Predicated region
        $region13: #{tpu_custom_call.1} parent=11 // pred_check
          %p134 = pneg %p67
        $region14: #{tpu_custom_call.1} parent=11 // pred_check_branch
          %136 = sbr.rel (%p134) target = $region16
        $region15: #{tpu_custom_call.1} parent=11 // pred_region
          %138 = vsyncadd [#allocation6], 0
          %s139 = sshll.u32 %s1, 4
          %s140 = int_to_ptr.hbm [resolvable:$true] %s139
          %s141 = sshll.u32 [#allocation5], 4
          %s142 = int_to_ptr.vmem [resolvable:$true] %s141
          %147 = dma.hbm_to_vmem [thread:$0]  %s140, 2048, %s142, [#allocation6], 128, 128, 8
        $region16: #{tpu_custom_call.1} parent=11 // pred_fallthru
          _
      $region12: #{tpu_custom_call.1} parent=5 // pred_fallthru
        _
      %p148 = scmp.lt.s32.totalorder %s20, 4
      // Predicated region
      $region17: #{tpu_custom_call.1} parent=5 // pred_check
        %p149 = pneg %p148
      $region18: #{tpu_custom_call.1} parent=5 // pred_check_branch
        %151 = sbr.rel (%p149) target = $region20
      $region19: #{tpu_custom_call.1} parent=5 // pred_region
        // Predicated region
        $region21: #{tpu_custom_call.1} parent=19 // pred_check
          %p152 = pneg %p40
        $region22: #{tpu_custom_call.1} parent=19 // pred_check_branch
          %154 = sbr.rel (%p152) target = $region24
        $region23: #{tpu_custom_call.1} parent=19 // pred_region
          %s155 = sand.u32 %s30, 1
          %s156 = scalar_lea.sflag [#allocation3], %s155
          %s157 = sand.u32 %s30, 1
          %s158 = smul.addr %s157, 128
          %s159 = scalar_lea.vmem [#allocation2], %s158
          %s160 = smul.u32 16, %s20
          %162 = vsyncadd %s156, 0
          %s163 = smul.addr %s160, 8
          %s164 = scalar_lea.hbm %s0, %s163
          %s165 = sshll.u32 %s164, 4
          %s166 = int_to_ptr.hbm [resolvable:$true] %s165
          %s167 = sshll.u32 %s159, 4
          %s168 = int_to_ptr.vmem [resolvable:$true] %s167
          %173 = dma.hbm_to_vmem [thread:$0]  %s166, 2048, %s168, %s156, 128, 128, 8
        $region24: #{tpu_custom_call.1} parent=19 // pred_fallthru
          _
      $region20: #{tpu_custom_call.1} parent=5 // pred_fallthru
        _
      %p174 = scmp.le.s32.totalorder 1, %s20
      %p175 = scmp.lt.s32.totalorder %s20, 5
      %p176 = pnand %p174, %p175
      %p177 = pneg %p176
      // Predicated region
      $region25: #{tpu_custom_call.1} parent=5 // pred_check
        _
      $region26: #{tpu_custom_call.1} parent=5 // pred_check_branch
        %179 = sbr.rel (%p176) target = $region28
      $region27: #{tpu_custom_call.1} parent=5 // pred_region
        %s180 = ssub.s32 %s20, 1
        %s181 = sand.u32 %s33, 1
        %s182 = scalar_lea.sflag [#allocation3], %s181
        %s183 = sand.u32 %s33, 1
        %s184 = smul.addr %s183, 128
        %s185 = scalar_lea.vmem [#allocation2], %s184
        // Predicated region
        $region29: #{tpu_custom_call.1} parent=27 // pred_check
          %p186 = pneg %p46
        $region30: #{tpu_custom_call.1} parent=27 // pred_check_branch
          %188 = sbr.rel (%p186) target = $region32
        $region31: #{tpu_custom_call.1} parent=27 // pred_region
          %190 = dma.done %s182, 2048
        $region32: #{tpu_custom_call.1} parent=27 // pred_fallthru
          _
        // Predicated region
        $region33: #{tpu_custom_call.1} parent=27 // pred_check
          %p191 = pneg %p67
        $region34: #{tpu_custom_call.1} parent=27 // pred_check_branch
          %193 = sbr.rel (%p191) target = $region36
        $region35: #{tpu_custom_call.1} parent=27 // pred_region
          %195 = dma.done [#allocation6], 2048
        $region36: #{tpu_custom_call.1} parent=27 // pred_fallthru
          _
        %s196 = sand.u32 %s33, 1
        %s197 = scalar_lea.sflag [#allocation3], %s196
        %s198 = sand.u32 %s33, 1
        %s199 = smul.addr %s198, 128
        %s200 = scalar_lea.vmem [#allocation2], %s199
        %p201 = pneg %p46
        %p202 = pneg %p43
        %p203 = pneg %p67
        %p204 = pneg %p64
        %p205 = pneg %p93
        %p206 = pneg %p90
        %s207 = sand.u32 %s80, 1
        %s208 = scalar_lea.sflag [#allocation4], %s207
        %s209 = sand.u32 %s80, 1
        %s210 = smul.addr %s209, 128
        %s211 = scalar_lea.vmem [#allocation7], %s210
        %p212 = pneg %p119
        %p213 = pneg %p116
        %s214 = sand.u32 %s106, 1
        %s215 = scalar_lea.sflag [#allocation9], %s214
        %s216 = sand.u32 %s106, 1
        %s217 = smul.addr %s216, 8
        %s218 = scalar_lea.vmem [#allocation8], %s217
        %s219 = smul.u32 16, %s25
        %s220 = smul.u32 16, %s25
        %v221 = vld [vmem:[%s185] sm:$0xff]
        %v222 = vld [vmem:[%s185 + $0x8] sm:$0xff]
        %v223 = vld [vmem:[%s185 + $0x10] sm:$0xff]
        %v224 = vld [vmem:[%s185 + $0x18] sm:$0xff]
        %v225 = vld [vmem:[%s185 + $0x20] sm:$0xff]
        %v226 = vld [vmem:[%s185 + $0x28] sm:$0xff]
        %v227 = vld [vmem:[%s185 + $0x30] sm:$0xff]
        %v228 = vld [vmem:[%s185 + $0x38] sm:$0xff]
        %v229 = vld [vmem:[%s185 + $0x40] sm:$0xff]
        %v230 = vld [vmem:[%s185 + $0x48] sm:$0xff]
        %v231 = vld [vmem:[%s185 + $0x50] sm:$0xff]
        %v232 = vld [vmem:[%s185 + $0x58] sm:$0xff]
        %v233 = vld [vmem:[%s185 + $0x60] sm:$0xff]
        %v234 = vld [vmem:[%s185 + $0x68] sm:$0xff]
        %v235 = vld [vmem:[%s185 + $0x70] sm:$0xff]
        %v236 = vld [vmem:[%s185 + $0x78] sm:$0xff]
        %v237 = vld [vmem:[#allocation5] sm:$0xff]
        %v238 = vld [vmem:[#allocation5 + $0x8] sm:$0xff]
        %v239 = vld [vmem:[#allocation5 + $0x10] sm:$0xff]
        %v240 = vld [vmem:[#allocation5 + $0x18] sm:$0xff]
        %v241 = vld [vmem:[#allocation5 + $0x20] sm:$0xff]
        %v242 = vld [vmem:[#allocation5 + $0x28] sm:$0xff]
        %v243 = vld [vmem:[#allocation5 + $0x30] sm:$0xff]
        %v244 = vld [vmem:[#allocation5 + $0x38] sm:$0xff]
        %v245 = vld [vmem:[#allocation5 + $0x40] sm:$0xff]
        %v246 = vld [vmem:[#allocation5 + $0x48] sm:$0xff]
        %v247 = vld [vmem:[#allocation5 + $0x50] sm:$0xff]
        %v248 = vld [vmem:[#allocation5 + $0x58] sm:$0xff]
        %v249 = vld [vmem:[#allocation5 + $0x60] sm:$0xff]
        %v250 = vld [vmem:[#allocation5 + $0x68] sm:$0xff]
        %v251 = vld [vmem:[#allocation5 + $0x70] sm:$0xff]
        %v252 = vld [vmem:[#allocation5 + $0x78] sm:$0xff]
        %253 = vmatpush.msra.mxu0 %v252
        %254 = vmatpush.msra.mxu0 %v251
        %255 = vmatpush.msra.mxu0 %v250
        %256 = vmatpush.msra.mxu0 %v249
        %257 = vmatpush.msra.mxu0 %v248
        %258 = vmatpush.msra.mxu0 %v247
        %259 = vmatpush.msra.mxu0 %v246
        %260 = vmatpush.msra.mxu0 %v245
        %261 = vmatpush.msra.mxu0 %v244
        %262 = vmatpush.msra.mxu0 %v243
        %263 = vmatpush.msra.mxu0 %v242
        %264 = vmatpush.msra.mxu0 %v241
        %265 = vmatpush.msra.mxu0 %v240
        %266 = vmatpush.msra.mxu0 %v239
        %267 = vmatpush.msra.mxu0 %v238
        %268 = vmatpush.msra.mxu0 %v237
        %269 = vmatmul.f32.gmra.mxu0 %v221
        %v270 = vpop.f32.mrf.mxu0
        %v271 = vadd.f32 0.0, %v270
        %272 = vmatmul.f32.gmra.mxu0 %v222
        %v273 = vpop.f32.mrf.mxu0
        %v274 = vadd.f32 0.0, %v273
        %275 = vmatmul.f32.gmra.mxu0 %v223
        %v276 = vpop.f32.mrf.mxu0
        %v277 = vadd.f32 0.0, %v276
        %278 = vmatmul.f32.gmra.mxu0 %v224
        %v279 = vpop.f32.mrf.mxu0
        %v280 = vadd.f32 0.0, %v279
        %281 = vmatmul.f32.gmra.mxu0 %v225
        %v282 = vpop.f32.mrf.mxu0
        %v283 = vadd.f32 0.0, %v282
        %284 = vmatmul.f32.gmra.mxu0 %v226
        %v285 = vpop.f32.mrf.mxu0
        %v286 = vadd.f32 0.0, %v285
        %287 = vmatmul.f32.gmra.mxu0 %v227
        %v288 = vpop.f32.mrf.mxu0
        %v289 = vadd.f32 0.0, %v288
        %290 = vmatmul.f32.gmra.mxu0 %v228
        %v291 = vpop.f32.mrf.mxu0
        %v292 = vadd.f32 0.0, %v291
        %293 = vmatmul.f32.gmra.mxu0 %v229
        %v294 = vpop.f32.mrf.mxu0
        %v295 = vadd.f32 0.0, %v294
        %296 = vmatmul.f32.gmra.mxu0 %v230
        %v297 = vpop.f32.mrf.mxu0
        %v298 = vadd.f32 0.0, %v297
        %299 = vmatmul.f32.gmra.mxu0 %v231
        %v300 = vpop.f32.mrf.mxu0
        %v301 = vadd.f32 0.0, %v300
        %302 = vmatmul.f32.gmra.mxu0 %v232
        %v303 = vpop.f32.mrf.mxu0
        %v304 = vadd.f32 0.0, %v303
        %305 = vmatmul.f32.gmra.mxu0 %v233
        %v306 = vpop.f32.mrf.mxu0
        %v307 = vadd.f32 0.0, %v306
        %308 = vmatmul.f32.gmra.mxu0 %v234
        %v309 = vpop.f32.mrf.mxu0
        %v310 = vadd.f32 0.0, %v309
        %311 = vmatmul.f32.gmra.mxu0 %v235
        %v312 = vpop.f32.mrf.mxu0
        %v313 = vadd.f32 0.0, %v312
        %314 = vmatmul.f32.gmra.mxu0 %v236
        %v315 = vpop.f32.mrf.mxu0
        %v316 = vadd.f32 0.0, %v315
        %317 = vdwg.mxu0
        %318 = vst [vmem:[%s211] sm:$0xff] %v271
        %319 = vst [vmem:[%s211 + $0x8] sm:$0xff] %v274
        %320 = vst [vmem:[%s211 + $0x10] sm:$0xff] %v277
        %321 = vst [vmem:[%s211 + $0x18] sm:$0xff] %v280
        %322 = vst [vmem:[%s211 + $0x20] sm:$0xff] %v283
        %323 = vst [vmem:[%s211 + $0x28] sm:$0xff] %v286
        %324 = vst [vmem:[%s211 + $0x30] sm:$0xff] %v289
        %325 = vst [vmem:[%s211 + $0x38] sm:$0xff] %v292
        %326 = vst [vmem:[%s211 + $0x40] sm:$0xff] %v295
        %327 = vst [vmem:[%s211 + $0x48] sm:$0xff] %v298
        %328 = vst [vmem:[%s211 + $0x50] sm:$0xff] %v301
        %329 = vst [vmem:[%s211 + $0x58] sm:$0xff] %v304
        %330 = vst [vmem:[%s211 + $0x60] sm:$0xff] %v307
        %331 = vst [vmem:[%s211 + $0x68] sm:$0xff] %v310
        %332 = vst [vmem:[%s211 + $0x70] sm:$0xff] %v313
        %333 = vst [vmem:[%s211 + $0x78] sm:$0xff] %v316
        %v334 = vadd.f32 %v271, %v274
        %v335 = vadd.f32 %v334, %v277
        %v336 = vadd.f32 %v335, %v280
        %v337 = vadd.f32 %v336, %v283
        %v338 = vadd.f32 %v337, %v286
        %v339 = vadd.f32 %v338, %v289
        %v340 = vadd.f32 %v339, %v292
        %v341 = vadd.f32 %v340, %v295
        %v342 = vadd.f32 %v341, %v298
        %v343 = vadd.f32 %v342, %v301
        %v344 = vadd.f32 %v343, %v304
        %v345 = vadd.f32 %v344, %v307
        %v346 = vadd.f32 %v345, %v310
        %v347 = vadd.f32 %v346, %v313
        %v348 = vadd.f32 %v347, %v316
        %v349 = vrot.slane %v348, 4
        %v350 = vadd.f32 %v348, %v349
        %v351 = vrot.slane %v350, 2
        %v352 = vadd.f32 %v350, %v351
        %v353 = vrot.slane %v352, 1
        %v354 = vadd.f32 %v352, %v353
        %v355 = vmul.f32 %v271, %v271
        %v356 = vmul.f32 %v274, %v274
        %v357 = vmul.f32 %v277, %v277
        %v358 = vmul.f32 %v280, %v280
        %v359 = vmul.f32 %v283, %v283
        %v360 = vmul.f32 %v286, %v286
        %v361 = vmul.f32 %v289, %v289
        %v362 = vmul.f32 %v292, %v292
        %v363 = vmul.f32 %v295, %v295
        %v364 = vmul.f32 %v298, %v298
        %v365 = vmul.f32 %v301, %v301
        %v366 = vmul.f32 %v304, %v304
        %v367 = vmul.f32 %v307, %v307
        %v368 = vmul.f32 %v310, %v310
        %v369 = vmul.f32 %v313, %v313
        %v370 = vmul.f32 %v316, %v316
        %v371 = vadd.f32 %v355, %v356
        %v372 = vadd.f32 %v371, %v357
        %v373 = vadd.f32 %v372, %v358
        %v374 = vadd.f32 %v373, %v359
        %v375 = vadd.f32 %v374, %v360
        %v376 = vadd.f32 %v375, %v361
        %v377 = vadd.f32 %v376, %v362
        %v378 = vadd.f32 %v377, %v363
        %v379 = vadd.f32 %v378, %v364
        %v380 = vadd.f32 %v379, %v365
        %v381 = vadd.f32 %v380, %v366
        %v382 = vadd.f32 %v381, %v367
        %v383 = vadd.f32 %v382, %v368
        %v384 = vadd.f32 %v383, %v369
        %v385 = vadd.f32 %v384, %v370
        %v386 = vrot.slane %v385, 4
        %v387 = vadd.f32 %v385, %v386
        %v388 = vrot.slane %v387, 2
        %v389 = vadd.f32 %v387, %v388
        %v390 = vrot.slane %v389, 1
        %v391 = vadd.f32 %v389, %v390
        %v392 = vlaneseq
        %v393 = vshrl.u32 %v392, 7
        %vm394 = vcmp.eq.s32.totalorder %v393, 0
        %vm395 = vcmp.eq.s32.totalorder %v393, 1
        %v396 = vsel %vm395, %v391, 0.0
        %v397 = vsel %vm394, %v354, %v396
        %398 = vst [vmem:[%s218] sm:$0xff] %v397
        %s399 = sand.u32 %s80, 1
        %s400 = scalar_lea.sflag [#allocation4], %s399
        %s401 = sand.u32 %s80, 1
        %s402 = smul.addr %s401, 128
        %s403 = scalar_lea.vmem [#allocation7], %s402
        %s404 = sand.u32 %s106, 1
        %s405 = scalar_lea.sflag [#allocation9], %s404
        %s406 = sand.u32 %s106, 1
        %s407 = smul.addr %s406, 8
        %s408 = scalar_lea.vmem [#allocation8], %s407
        // Predicated region
        $region37: #{tpu_custom_call.1} parent=27 // pred_check
          %p409 = pneg %p90
        $region38: #{tpu_custom_call.1} parent=27 // pred_check_branch
          %411 = sbr.rel (%p409) target = $region40
        $region39: #{tpu_custom_call.1} parent=27 // pred_region
          %s412 = smul.u32 16, %s25
          %414 = vsyncadd %s400, 0
          %s415 = smul.addr %s412, 8
          %s416 = scalar_lea.hbm %s2, %s415
          %s417 = sshll.u32 %s403, 4
          %s418 = int_to_ptr.vmem [resolvable:$true] %s417
          %s419 = sshll.u32 %s416, 4
          %s420 = int_to_ptr.hbm [resolvable:$true] %s419
          %425 = dma.vmem_to_hbm [thread:$0]  %s418, 2048, %s420, %s400, 128, 128, 8
        $region40: #{tpu_custom_call.1} parent=27 // pred_fallthru
          _
        // Predicated region
        $region41: #{tpu_custom_call.1} parent=27 // pred_check
          %p426 = pneg %p116
        $region42: #{tpu_custom_call.1} parent=27 // pred_check_branch
          %428 = sbr.rel (%p426) target = $region44
        $region43: #{tpu_custom_call.1} parent=27 // pred_region
          %430 = vsyncadd %s405, 0
          %s431 = smul.addr %s25, 8
          %s432 = scalar_lea.hbm %s3, %s431
          %s434 = sshll.u32 %s408, 4
          %s435 = int_to_ptr.vmem [resolvable:$true] %s434
          %s436 = sshll.u32 %s432, 4
          %s437 = int_to_ptr.hbm [resolvable:$true] %s436
          %439 = dma.vmem_to_hbm [thread:$0]  %s435, 128, %s437, %s405
        $region44: #{tpu_custom_call.1} parent=27 // pred_fallthru
          _
      $region28: #{tpu_custom_call.1} parent=5 // pred_fallthru
        _
      %p440 = scmp.le.s32.totalorder 2, %s20
      // Predicated region
      $region45: #{tpu_custom_call.1} parent=5 // pred_check
        %p441 = pneg %p440
      $region46: #{tpu_custom_call.1} parent=5 // pred_check_branch
        %443 = sbr.rel (%p441) target = $region48
      $region47: #{tpu_custom_call.1} parent=5 // pred_region
        %s444 = ssub.s32 %s20, 2
        // Predicated region
        $region49: #{tpu_custom_call.1} parent=47 // pred_check
          %p445 = pneg %p96
        $region50: #{tpu_custom_call.1} parent=47 // pred_check_branch
          %447 = sbr.rel (%p445) target = $region52
        $region51: #{tpu_custom_call.1} parent=47 // pred_region
          %s448 = sand.u32 %s81, 1
          %s449 = scalar_lea.sflag [#allocation4], %s448
          %s450 = sand.u32 %s81, 1
          %s451 = smul.addr %s450, 128
          %s452 = scalar_lea.vmem [#allocation7], %s451
          %454 = dma.done %s449, 2048
        $region52: #{tpu_custom_call.1} parent=47 // pred_fallthru
          _
        // Predicated region
        $region53: #{tpu_custom_call.1} parent=47 // pred_check
          %p455 = pneg %p122
        $region54: #{tpu_custom_call.1} parent=47 // pred_check_branch
          %457 = sbr.rel (%p455) target = $region56
        $region55: #{tpu_custom_call.1} parent=47 // pred_region
          %s458 = sand.u32 %s107, 1
          %s459 = scalar_lea.sflag [#allocation9], %s458
          %s460 = sand.u32 %s107, 1
          %s461 = smul.addr %s460, 8
          %s462 = scalar_lea.vmem [#allocation8], %s461
          %464 = dma.done %s459, 128
        $region56: #{tpu_custom_call.1} parent=47 // pred_fallthru
          _
      $region48: #{tpu_custom_call.1} parent=5 // pred_fallthru
        _
    $region6: #{tpu_custom_call.1} parent=1 // loop_footer
      %s24 = sadd.s32 1, %s20
    $region7: #{tpu_custom_call.1} parent=1 // loop_footer_branch
      %19 = sbr.rel target = $region3
    $region8: #{tpu_custom_call.1} parent=1 // loop_exit
      _
    %465 = vsyncpa [#allocation3], 1
    %s466 = scalar_lea.sflag [#allocation3], 1
    %467 = vsyncpa %s466, 1
    %468 = vsyncpa [#allocation6], 1
    %469 = vsyncpa [#allocation4], 1
    %s470 = scalar_lea.sflag [#allocation4], 1
    %471 = vsyncpa %s470, 1
    %472 = vsyncpa [#allocation9], 1
    %s473 = scalar_lea.sflag [#allocation9], 1
    %474 = vsyncpa %s473, 1

</llo_original>
